<compile_context>
chip_gen: v5e
topology: v5e:2x2
jax: 0.10.0
libtpu: 0.0.40
codegen_flags: <defaults>
</compile_context>

<pallas_src>
import functools
import math

import jax
import jax.numpy as jnp
from jax.experimental import pallas as pl
from jax.experimental.pallas import tpu as pltpu

LANE = 128          # vreg lane width (batch lives on lanes now)
SUBLANE_F32 = 8     # f32 packs 8 rows per vreg (out_dim padded to this)


def _round_up(x, m):
    return (x + m - 1) // m * m


# ----------------------------- Pallas kernel ------------------------------

def discrete_policy_kernel(xt_ref, w0_ref, b0_ref, w1_ref, b1_ref,
                           wo_ref, bo_ref, logp_ref):
    """Fused 3-layer MLP + log_softmax on one transposed batch tile.

    All refs hold the batch on the lane axis:
      xt_ref : (in_dim, TB) bf16        state tile (transposed)
      w*     : (out, in)   bf16         PyTorch-layout weights
      b*     : (out, 1)    f32          biases (bo padded rows = -1e30)
      logp   : (out_pad, TB) f32        normalized log-probs (transposed)
    Matmul operands are bf16 with f32 accumulation; tanh/exp/log are f32.
    """
    xt = xt_ref[...]                                              # (in, TB)

    # hidden_0 + tanh  -> (hid, TB)
    h = jnp.dot(w0_ref[...], xt, preferred_element_type=jnp.float32) + b0_ref[...]
    h = jnp.tanh(h)

    # hidden_1 + tanh  -> (hid, TB)
    h = jnp.dot(w1_ref[...], h.astype(w1_ref.dtype),
                preferred_element_type=jnp.float32) + b1_ref[...]
    h = jnp.tanh(h)

    # out_layer -> logits (out_pad, TB).  Padded action rows get a -1e30 bias
    # (baked into bo) on top of all-zero Wo rows, so the sublane-axis max/sum
    # reductions below ignore them with no explicit mask.
    logits = jnp.dot(wo_ref[...], h.astype(wo_ref.dtype),
                     preferred_element_type=jnp.float32) + bo_ref[...]

    m = jnp.max(logits, axis=0, keepdims=True)
    lse = m + jnp.log(jnp.sum(jnp.exp(logits - m), axis=0, keepdims=True))
    logp_ref[...] = logits - lse


# ------------------------------- wrapper -----------------------------------

def discrete_policy_forward(state, kernel_params, *, out_dim, block_b=4096,
                            compute_dtype=jnp.bfloat16):
    """Returns normalized log-probabilities (== Categorical(logits=...).logits)."""
    w0, b0, w1, b1, wo, bo = kernel_params
    B, in_dim = state.shape
    hid = w0.shape[0]
    out_pad = wo.shape[0]

    # Batch tile: multiple of 128 (it is the lane dim of every tensor).  Large
    # tiles amortize the ~0.35 us per-grid-step overhead; cap at half the
    # batch so a large batch always yields >= 2 grid steps (v7x megacore).
    b_ceil = _round_up(B, LANE)
    tb = _round_up(min(block_b, b_ceil), LANE)
    if b_ceil > LANE and _round_up(B, tb) // tb < 2:
        tb = _round_up(pl.cdiv(b_ceil, 2), LANE)
    b_pad = _round_up(B, tb)

    # Transpose + cast outside the kernel: (B, in) f32 -> (in, b_pad) bf16.
    xt = state.astype(compute_dtype).T
    if b_pad != B:
        xt = jnp.pad(xt, ((0, 0), (0, b_pad - B)))

    grid = (b_pad // tb,)

    # Tight VMEM budget: weights (resident) + double-buffered state/out tiles
    # + ~4 fused f32 temporaries of (hid, tb).  Fits easily in v7x's 64 MiB.
    weight_bytes = sum(int(p.size) * p.dtype.itemsize
                       for p in (w0, b0, w1, b1, wo, bo))
    io_bytes = 2 * (in_dim * tb * xt.dtype.itemsize + out_pad * tb * 4)
    tmp_bytes = 4 * hid * tb * 4
    vmem_limit = int(min(32 * 1024 * 1024,
                         max(8 * 1024 * 1024,
                             2 * (weight_bytes + io_bytes + tmp_bytes))))

    flops = 2 * b_pad * (in_dim * hid + hid * hid + hid * out_pad)
    transcendentals = b_pad * (2 * hid + out_pad)          # tanh x2 + exp
    bytes_accessed = (int(xt.size) * xt.dtype.itemsize + weight_bytes
                      + b_pad * out_pad * 4)

    def weight_spec(p):
        # Constant index_map -> weight stays VMEM-resident, DMA'd once.
        return pl.BlockSpec(p.shape, lambda i: (0, 0))

    log_probs_t = pl.pallas_call(
        discrete_policy_kernel,
        out_shape=jax.ShapeDtypeStruct((out_pad, b_pad), jnp.float32),
        grid_spec=pltpu.PrefetchScalarGridSpec(
            num_scalar_prefetch=0,
            grid=grid,
            in_specs=[
                pl.BlockSpec((in_dim, tb), lambda i: (0, i)),    # state tile
                weight_spec(w0), weight_spec(b0),
                weight_spec(w1), weight_spec(b1),
                weight_spec(wo), weight_spec(bo),
            ],
            out_specs=pl.BlockSpec((out_pad, tb), lambda i: (0, i)),
        ),
        compiler_params=pltpu.CompilerParams(
            dimension_semantics=("parallel",),   # v7x: shard batch over 2 TCs
            vmem_limit_bytes=vmem_limit,
        ),
        cost_estimate=pl.CostEstimate(
            flops=flops,
            transcendentals=transcendentals,
            bytes_accessed=bytes_accessed,
        ),
    )(xt, w0, b0, w1, b1, wo, bo)

    # Strip action-row / batch-lane padding and return (B, out_dim).
    return log_probs_t[:out_dim, :B].T


# --------------------------- parameter creation ----------------------------

def orthogonal_init(key, shape, gain):
    """Orthogonal init matching nn.init.orthogonal_ (PyTorch (out, in) shape)."""
    rows, cols = shape
    n_max, n_min = max(rows, cols), min(rows, cols)
    a = jax.random.normal(key, (n_max, n_min), dtype=jnp.float32)
    q, r = jnp.linalg.qr(a)
    q = q * jnp.sign(jnp.diagonal(r))
    if rows < cols:
        q = q.T
    return (gain * q[:rows, :cols]).astype(jnp.float32)


def make_params(key, in_dim, out_dim, hidden_dim, out_layer_gain,
                hidden_gain=math.sqrt(2)):
    """f32 params in PyTorch (out_features, in_features) layout."""
    k0, k1, k2 = jax.random.split(key, 3)
    w0 = orthogonal_init(k0, (hidden_dim, in_dim), hidden_gain)
    w1 = orthogonal_init(k1, (hidden_dim, hidden_dim), hidden_gain)
    wo = orthogonal_init(k2, (out_dim, hidden_dim), out_layer_gain)
    b0 = jnp.zeros((hidden_dim,), jnp.float32)
    b1 = jnp.zeros((hidden_dim,), jnp.float32)
    bo = jnp.zeros((out_dim,), jnp.float32)
    return (w0, b0, w1, b1, wo, bo)


def pad_params_for_kernel(params, compute_dtype=jnp.bfloat16):
    """Prepare params for the batch-in-lanes kernel.

    Weights stay in (out, in) layout and are cast to the low-precision matmul
    dtype; biases become (out, 1) f32 columns.  Only the out_layer rows are
    padded to a multiple of 8 sublanes; the padded Wo rows are zero and the
    padded bo rows are -1e30, which bakes the action mask into the bias so the
    kernel's log_softmax reductions need no explicit masking.
    """
    w0, b0, w1, b1, wo, bo = params
    out_dim = wo.shape[0]
    out_pad = _round_up(out_dim, SUBLANE_F32)

    w0p = w0.astype(compute_dtype)
    w1p = w1.astype(compute_dtype)
    wop = jnp.pad(wo, ((0, out_pad - out_dim), (0, 0))).astype(compute_dtype)
    b0p = b0.reshape(-1, 1).astype(jnp.float32)
    b1p = b1.reshape(-1, 1).astype(jnp.float32)
    bop = jnp.pad(bo.reshape(-1, 1), ((0, out_pad - out_dim), (0, 0)),
                  constant_values=-1e30).astype(jnp.float32)
    return (w0p, b0p, w1p, b1p, wop, bop)


# ------------------------------ reference ----------------------------------

def reference_forward(state, params):
    w0, b0, w1, b1, wo, bo = params
    h = jnp.tanh(state @ w0.T + b0)
    h = jnp.tanh(h @ w1.T + b1)
    logits = h @ wo.T + bo
    return jax.nn.log_softmax(logits, axis=-1)


# -------------------------------- main --------------------------------------

if __name__ == "__main__":
    key = jax.random.PRNGKey(0)
    k_x, k_p = jax.random.split(key)

    # DiscretePolicy(in_dim=16, out_dim=4, n_hidden=2, hidden_dim=32,
    #                out_layer_gain=0.01), batch of 64 states.
    batch, in_dim, out_dim, hidden_dim = 64, 16, 4, 32
    out_layer_gain = 0.01

    state = jax.random.normal(k_x, (batch, in_dim), dtype=jnp.float32)
    params = make_params(k_p, in_dim, out_dim, hidden_dim, out_layer_gain)
    kernel_params = pad_params_for_kernel(params, compute_dtype=jnp.bfloat16)

    log_probs = discrete_policy_forward(state, kernel_params, out_dim=out_dim)
    log_probs = jax.block_until_ready(log_probs)

    ref_logp = reference_forward(state, params)
    assert log_probs.shape == (batch, out_dim)
    # bf16 matmul operands vs. f32 reference -> loose tolerance.
    assert jnp.allclose(log_probs, ref_logp, atol=2e-2, rtol=2e-2)
    # Rows must be valid normalized distributions.
    assert jnp.allclose(jnp.sum(jnp.exp(log_probs), axis=-1), 1.0, atol=1e-3)

    # TODO(synk): Categorical .sample()/.argmax() (the random draw) is done
    # outside the kernel; the distribution is fully determined by log_probs.
    print("KERNEL_OK")
</pallas_src>

<mosaic_0001>
module attributes {stable_mosaic.version = 11 : i64} {
  func.func @discrete_policy_kernel(%arg0: i32, %arg1: memref<16x128xbf16, #tpu.memory_space<vmem>>, %arg2: memref<32x16xbf16, #tpu.memory_space<vmem>>, %arg3: memref<32x1xf32, #tpu.memory_space<vmem>>, %arg4: memref<32x32xbf16, #tpu.memory_space<vmem>>, %arg5: memref<32x1xf32, #tpu.memory_space<vmem>>, %arg6: memref<8x32xbf16, #tpu.memory_space<vmem>>, %arg7: memref<8x1xf32, #tpu.memory_space<vmem>>, %arg8: memref<8x128xf32, #tpu.memory_space<vmem>>) attributes {dimension_semantics = [#tpu.dimension_semantics<parallel>], iteration_bounds = array<i64: 1>, scalar_prefetch = 0 : i64, scratch_operands = 0 : i64, tpu.core_type = #tpu.core_type<tc>, window_params = [{transform_indices = @transform_0, window_bounds = array<i64: 16, 128>}, {pipeline_mode = #tpu.pipeline_mode<synchronous>, transform_indices = @transform_1, window_bounds = array<i64: 32, 16>}, {pipeline_mode = #tpu.pipeline_mode<synchronous>, transform_indices = @transform_2, window_bounds = array<i64: 32, 1>}, {pipeline_mode = #tpu.pipeline_mode<synchronous>, transform_indices = @transform_3, window_bounds = array<i64: 32, 32>}, {pipeline_mode = #tpu.pipeline_mode<synchronous>, transform_indices = @transform_4, window_bounds = array<i64: 32, 1>}, {pipeline_mode = #tpu.pipeline_mode<synchronous>, transform_indices = @transform_5, window_bounds = array<i64: 8, 32>}, {pipeline_mode = #tpu.pipeline_mode<synchronous>, transform_indices = @transform_6, window_bounds = array<i64: 8, 1>}, {transform_indices = @transform_7, window_bounds = array<i64: 8, 128>}]} {
    %c0 = arith.constant 0 : index
    %c0_0 = arith.constant 0 : index
    %0 = vector.load %arg1[%c0, %c0_0] : memref<16x128xbf16, #tpu.memory_space<vmem>>, vector<16x128xbf16>
    %c0_1 = arith.constant 0 : index
    %c0_2 = arith.constant 0 : index
    %1 = vector.load %arg2[%c0_1, %c0_2] : memref<32x16xbf16, #tpu.memory_space<vmem>>, vector<32x16xbf16>
    %cst = arith.constant dense<0.000000e+00> : vector<32x128xf32>
    %2 = tpu.matmul %1, %0, %cst {dimension_numbers = #tpu.dot_dimension_numbers<[1], [0], [0], [1], [0, 0, 1, 1], [], []>} : vector<32x16xbf16>, vector<16x128xbf16>, vector<32x128xf32> -> vector<32x128xf32>
    %c0_3 = arith.constant 0 : index
    %c0_4 = arith.constant 0 : index
    %3 = vector.load %arg3[%c0_3, %c0_4] : memref<32x1xf32, #tpu.memory_space<vmem>>, vector<32x1xf32>
    %4 = vector.broadcast %3 : vector<32x1xf32> to vector<32x128xf32>
    %5 = arith.addf %2, %4 : vector<32x128xf32>
    %6 = math.tanh %5 : vector<32x128xf32>
    %c0_5 = arith.constant 0 : index
    %c0_6 = arith.constant 0 : index
    %7 = vector.load %arg4[%c0_5, %c0_6] : memref<32x32xbf16, #tpu.memory_space<vmem>>, vector<32x32xbf16>
    %8 = arith.truncf %6 : vector<32x128xf32> to vector<32x128xbf16>
    %cst_7 = arith.constant dense<0.000000e+00> : vector<32x128xf32>
    %9 = tpu.matmul %7, %8, %cst_7 {dimension_numbers = #tpu.dot_dimension_numbers<[1], [0], [0], [1], [0, 0, 1, 1], [], []>} : vector<32x32xbf16>, vector<32x128xbf16>, vector<32x128xf32> -> vector<32x128xf32>
    %c0_8 = arith.constant 0 : index
    %c0_9 = arith.constant 0 : index
    %10 = vector.load %arg5[%c0_8, %c0_9] : memref<32x1xf32, #tpu.memory_space<vmem>>, vector<32x1xf32>
    %11 = vector.broadcast %10 : vector<32x1xf32> to vector<32x128xf32>
    %12 = arith.addf %9, %11 : vector<32x128xf32>
    %13 = math.tanh %12 : vector<32x128xf32>
    %c0_10 = arith.constant 0 : index
    %c0_11 = arith.constant 0 : index
    %14 = vector.load %arg6[%c0_10, %c0_11] : memref<8x32xbf16, #tpu.memory_space<vmem>>, vector<8x32xbf16>
    %15 = arith.truncf %13 : vector<32x128xf32> to vector<32x128xbf16>
    %cst_12 = arith.constant dense<0.000000e+00> : vector<8x128xf32>
    %16 = tpu.matmul %14, %15, %cst_12 {dimension_numbers = #tpu.dot_dimension_numbers<[1], [0], [0], [1], [0, 0, 1, 1], [], []>} : vector<8x32xbf16>, vector<32x128xbf16>, vector<8x128xf32> -> vector<8x128xf32>
    %c0_13 = arith.constant 0 : index
    %c0_14 = arith.constant 0 : index
    %17 = vector.load %arg7[%c0_13, %c0_14] : memref<8x1xf32, #tpu.memory_space<vmem>>, vector<8x1xf32>
    %18 = vector.broadcast %17 : vector<8x1xf32> to vector<8x128xf32>
    %19 = arith.addf %16, %18 : vector<8x128xf32>
    %cst_15 = arith.constant dense<0xFF800000> : vector<128xf32>
    %20 = vector.multi_reduction <maximumf>, %19, %cst_15 [0] : vector<8x128xf32> to vector<128xf32>
    %21 = vector.shape_cast %20 : vector<128xf32> to vector<1x128xf32>
    %22 = vector.broadcast %21 : vector<1x128xf32> to vector<8x128xf32>
    %23 = arith.subf %19, %22 : vector<8x128xf32>
    %24 = math.exp %23 : vector<8x128xf32>
    %cst_16 = arith.constant dense<0.000000e+00> : vector<128xf32>
    %25 = vector.multi_reduction <add>, %24, %cst_16 [0] : vector<8x128xf32> to vector<128xf32>
    %26 = vector.shape_cast %25 : vector<128xf32> to vector<1x128xf32>
    %27 = math.log %26 : vector<1x128xf32>
    %28 = arith.addf %21, %27 : vector<1x128xf32>
    %29 = vector.broadcast %28 : vector<1x128xf32> to vector<8x128xf32>
    %30 = arith.subf %19, %29 : vector<8x128xf32>
    %c0_17 = arith.constant 0 : index
    %c0_18 = arith.constant 0 : index
    %31 = vector.load %arg8[%c0_17, %c0_18] : memref<8x128xf32, #tpu.memory_space<vmem>>, vector<8x128xf32>
    tpu.vector_store %arg8[%c0_17, %c0_18], %30 {strides = array<i32>} : memref<8x128xf32, #tpu.memory_space<vmem>>, vector<8x128xf32>,
    return
  }
  func.func @transform_0(%arg0: i32) -> (i32, i32) {
    %c0_i32 = arith.constant 0 : i32
    %c0_i32_0 = arith.constant 0 : i32
    return %c0_i32, %arg0 : i32, i32
  }
  func.func @transform_1(%arg0: i32) -> (i32, i32) {
    %c0_i32 = arith.constant 0 : i32
    %c0_i32_0 = arith.constant 0 : i32
    %c0_i32_1 = arith.constant 0 : i32
    return %c0_i32, %c0_i32_0 : i32, i32
  }
  func.func @transform_2(%arg0: i32) -> (i32, i32) {
    %c0_i32 = arith.constant 0 : i32
    %c0_i32_0 = arith.constant 0 : i32
    %c0_i32_1 = arith.constant 0 : i32
    return %c0_i32, %c0_i32_0 : i32, i32
  }
  func.func @transform_3(%arg0: i32) -> (i32, i32) {
    %c0_i32 = arith.constant 0 : i32
    %c0_i32_0 = arith.constant 0 : i32
    %c0_i32_1 = arith.constant 0 : i32
    return %c0_i32, %c0_i32_0 : i32, i32
  }
  func.func @transform_4(%arg0: i32) -> (i32, i32) {
    %c0_i32 = arith.constant 0 : i32
    %c0_i32_0 = arith.constant 0 : i32
    %c0_i32_1 = arith.constant 0 : i32
    return %c0_i32, %c0_i32_0 : i32, i32
  }
  func.func @transform_5(%arg0: i32) -> (i32, i32) {
    %c0_i32 = arith.constant 0 : i32
    %c0_i32_0 = arith.constant 0 : i32
    %c0_i32_1 = arith.constant 0 : i32
    return %c0_i32, %c0_i32_0 : i32, i32
  }
  func.func @transform_6(%arg0: i32) -> (i32, i32) {
    %c0_i32 = arith.constant 0 : i32
    %c0_i32_0 = arith.constant 0 : i32
    %c0_i32_1 = arith.constant 0 : i32
    return %c0_i32, %c0_i32_0 : i32, i32
  }
  func.func @transform_7(%arg0: i32) -> (i32, i32) {
    %c0_i32 = arith.constant 0 : i32
    %c0_i32_0 = arith.constant 0 : i32
    return %c0_i32, %arg0 : i32, i32
  }
}

</mosaic_0001>

<llo_original>
// kernel: tpu_custom_call.1
$region0: #{tpu_custom_call.1}
  #allocation0 [shape = 'u32[]', space=smem, size = 0x4, offset = 0x4, fixed_abs, tag = 'smem constant byte address 0x4 - core index']
  #allocation1 [shape = 'u32[72,128]{1,0:T(1,128)}', space=vmem, size = 0x9000, scoped, tag = 'internal scratch']
  %s0 = inlined_call_operand.vmem [shape: bf16[16,128], index: 0, kind: input, shape index: {}]
  %s1 = inlined_call_operand.vmem [shape: bf16[32,16], index: 1, kind: input, shape index: {}]
  %s2 = inlined_call_operand.vmem [shape: f32[32,1], index: 2, kind: input, shape index: {}]
  %s3 = inlined_call_operand.vmem [shape: bf16[32,32], index: 3, kind: input, shape index: {}]
  %s4 = inlined_call_operand.vmem [shape: f32[32,1], index: 4, kind: input, shape index: {}]
  %s5 = inlined_call_operand.vmem [shape: bf16[8,32], index: 5, kind: input, shape index: {}]
  %s6 = inlined_call_operand.vmem [shape: f32[8,1], index: 6, kind: input, shape index: {}]
  %s7 = inlined_call_operand.hbm [shape: f32[8,128], index: 7, kind: output, shape index: {}]
  %s8 = sld [smem:[#allocation0]]
  $region38: #{tpu_custom_call.1} parent=0
    _
  %s10 = ssub.s32 1, %s8
  %s11 = scalar_select 0, %s10, %s8
  $region1: #{tpu_custom_call.1} parent=0
    #allocation2 [shape = 'u8[4096]{0}', space=vmem, size = 0x1000, scoped, tag = 'output window, operand 0, single buffered']
    #allocation3 [shape = 's32[1]{0}', space=sflag, size = 0x4, scoped, tag = 'scoped memory for tpu_custom_call.1']
    %12 = vsyncpa [#allocation3], 0
    // Predicated region
    $region2: #{tpu_custom_call.1} parent=1 // pred_check
      _
    $region3: #{tpu_custom_call.1} parent=1 // pred_check_branch
      %14 = sbr.rel (0) target = $region5
    $region4: #{tpu_custom_call.1} parent=1 // pred_region
      _
    $region5: #{tpu_custom_call.1} parent=1 // pred_fallthru
      _
    // Predicated region
    $region6: #{tpu_custom_call.1} parent=1 // pred_check
      _
    $region7: #{tpu_custom_call.1} parent=1 // pred_check_branch
      %16 = sbr.rel (0) target = $region9
    $region8: #{tpu_custom_call.1} parent=1 // pred_region
      _
    $region9: #{tpu_custom_call.1} parent=1 // pred_fallthru
      _
    // Predicated region
    $region10: #{tpu_custom_call.1} parent=1 // pred_check
      _
    $region11: #{tpu_custom_call.1} parent=1 // pred_check_branch
      %18 = sbr.rel (0) target = $region13
    $region12: #{tpu_custom_call.1} parent=1 // pred_region
      _
    $region13: #{tpu_custom_call.1} parent=1 // pred_fallthru
      _
    // Predicated region
    $region14: #{tpu_custom_call.1} parent=1 // pred_check
      _
    $region15: #{tpu_custom_call.1} parent=1 // pred_check_branch
      %20 = sbr.rel (0) target = $region17
    $region16: #{tpu_custom_call.1} parent=1 // pred_region
      _
    $region17: #{tpu_custom_call.1} parent=1 // pred_fallthru
      _
    // Predicated region
    $region18: #{tpu_custom_call.1} parent=1 // pred_check
      _
    $region19: #{tpu_custom_call.1} parent=1 // pred_check_branch
      %22 = sbr.rel (0) target = $region21
    $region20: #{tpu_custom_call.1} parent=1 // pred_region
      _
    $region21: #{tpu_custom_call.1} parent=1 // pred_fallthru
      _
    // Predicated region
    $region22: #{tpu_custom_call.1} parent=1 // pred_check
      _
    $region23: #{tpu_custom_call.1} parent=1 // pred_check_branch
      %24 = sbr.rel (0) target = $region25
    $region24: #{tpu_custom_call.1} parent=1 // pred_region
      _
    $region25: #{tpu_custom_call.1} parent=1 // pred_fallthru
      _
    // Predicated region
    $region26: #{tpu_custom_call.1} parent=1 // pred_check
      _
    $region27: #{tpu_custom_call.1} parent=1 // pred_check_branch
      %26 = sbr.rel (0) target = $region29
    $region28: #{tpu_custom_call.1} parent=1 // pred_region
      _
    $region29: #{tpu_custom_call.1} parent=1 // pred_fallthru
      _
    %v28 = vld [vmem:[%s0] sm:$0xf]
    %v29 = vld [vmem:[%s0 + $0x4] sm:$0xf]
    %v30 = vld [vmem:[%s1] sm:$0xf]
    %v31 = vld [vmem:[%s1 + $0x4] sm:$0xf]
    %v32 = vld [vmem:[%s1 + $0x8] sm:$0xf]
    %v33 = vld [vmem:[%s1 + $0xc] sm:$0xf]
    %v34 = vld [vmem:[%s2] sm:$0xff]
    %v35 = vld [vmem:[%s2 + $0x8] sm:$0xff]
    %v36 = vld [vmem:[%s2 + $0x10] sm:$0xff]
    %v37 = vld [vmem:[%s2 + $0x18] sm:$0xff]
    %39 = vset.pattern.permute.xlu0 0
    %40 = vperm.xlu0 %39, %v34
    %v41 = vpop.permute.xlu0 %40
    %44 = vset.pattern.permute.xlu0 0
    %45 = vperm.xlu0 %44, %v35
    %v46 = vpop.permute.xlu0 %45
    %49 = vset.pattern.permute.xlu0 0
    %50 = vperm.xlu0 %49, %v36
    %v51 = vpop.permute.xlu0 %50
    %54 = vset.pattern.permute.xlu0 0
    %55 = vperm.xlu0 %54, %v37
    %v56 = vpop.permute.xlu0 %55
    %v62 = vunpack.c.l.b16 %v30
    %v63 = vunpack.c.l.b16 %v31
    %v64 = vunpack.c.l.b16 %v32
    %v65 = vunpack.c.l.b16 %v33
    %v66 = vpack.c.b16 %v63, %v62
    %v67 = vpack.c.b16 %v65, %v64
    %v70 = vunpack.c.l.b16 %v28
    %v71 = vunpack.c.l.b16 %v29
    %v72 = vpack.c.b16 %v71, %v70
    %vm74 = vcmask 130048
    %v76 = vsel %vm74, %v66, 0
    %v79 = vsel %vm74, %v67, 0
    %81 = vmatpush.bf16.msra.mxu0 0
    %82 = vmatpush.bf16.msra.mxu0 0
    %83 = vmatpush.bf16.msra.mxu0 0
    %84 = vmatpush.bf16.msra.mxu0 0
    %85 = vmatpush.bf16.msra.mxu0 0
    %86 = vmatpush.bf16.msra.mxu0 0
    %87 = vmatpush.bf16.msra.mxu0 0
    %88 = vmatpush.bf16.msra.mxu0 %v72
    %89 = vmatmul.bf16.gmra.mxu0 %v76
    %v90 = vpop.f32.mrf.mxu0
    %v91 = vadd.f32 %v41, %v90
    %v92 = vpop.f32.mrf.mxu0
    %v93 = vadd.f32 %v46, %v92
    %94 = vmatmul.bf16.gmra.mxu0 %v79
    %v95 = vpop.f32.mrf.mxu0
    %v96 = vadd.f32 %v51, %v95
    %v97 = vpop.f32.mrf.mxu0
    %v98 = vadd.f32 %v56, %v97
    %99 = vdwg.mxu0
    %v100 = vtanh.pop %v91
    %v101 = vtanh.pop %v93
    %v102 = vtanh.pop %v96
    %v103 = vtanh.pop %v98
    %v104 = vld [vmem:[%s3] sm:$0xf]
    %v105 = vld [vmem:[%s3 + $0x4] sm:$0xf]
    %v106 = vld [vmem:[%s3 + $0x8] sm:$0xf]
    %v107 = vld [vmem:[%s3 + $0xc] sm:$0xf]
    %v108 = vpack.c.bf16 %v101, %v100
    %v109 = vpack.c.bf16 %v103, %v102
    %v110 = vld [vmem:[%s4] sm:$0xff]
    %v111 = vld [vmem:[%s4 + $0x8] sm:$0xff]
    %v112 = vld [vmem:[%s4 + $0x10] sm:$0xff]
    %v113 = vld [vmem:[%s4 + $0x18] sm:$0xff]
    %115 = vset.pattern.permute.xlu0 0
    %116 = vperm.xlu0 %115, %v110
    %v117 = vpop.permute.xlu0 %116
    %120 = vset.pattern.permute.xlu0 0
    %121 = vperm.xlu0 %120, %v111
    %v122 = vpop.permute.xlu0 %121
    %125 = vset.pattern.permute.xlu0 0
    %126 = vperm.xlu0 %125, %v112
    %v127 = vpop.permute.xlu0 %126
    %130 = vset.pattern.permute.xlu0 0
    %131 = vperm.xlu0 %130, %v113
    %v132 = vpop.permute.xlu0 %131
    %v138 = vunpack.c.l.b16 %v104
    %v139 = vunpack.c.l.b16 %v105
    %v140 = vunpack.c.l.b16 %v106
    %v141 = vunpack.c.l.b16 %v107
    %v142 = vpack.c.b16 %v139, %v138
    %v143 = vpack.c.b16 %v141, %v140
    %vm144 = vcmask 261120
    %v146 = vsel %vm144, %v142, 0
    %v149 = vsel %vm144, %v143, 0
    %151 = vmatpush.bf16.msra.mxu0 0
    %152 = vmatpush.bf16.msra.mxu0 0
    %153 = vmatpush.bf16.msra.mxu0 0
    %154 = vmatpush.bf16.msra.mxu0 0
    %155 = vmatpush.bf16.msra.mxu0 0
    %156 = vmatpush.bf16.msra.mxu0 0
    %157 = vmatpush.bf16.msra.mxu0 %v109
    %158 = vmatpush.bf16.msra.mxu0 %v108
    %159 = vmatmul.bf16.gmra.mxu0 %v146
    %v160 = vpop.f32.mrf.mxu0
    %v161 = vadd.f32 %v117, %v160
    %v162 = vpop.f32.mrf.mxu0
    %v163 = vadd.f32 %v122, %v162
    %164 = vmatmul.bf16.gmra.mxu0 %v149
    %v165 = vpop.f32.mrf.mxu0
    %v166 = vadd.f32 %v127, %v165
    %v167 = vpop.f32.mrf.mxu0
    %v168 = vadd.f32 %v132, %v167
    %169 = vdwg.mxu0
    %v170 = vtanh.pop %v161
    %v171 = vtanh.pop %v163
    %v172 = vtanh.pop %v166
    %v173 = vtanh.pop %v168
    %v174 = vld [vmem:[%s5] sm:$0xf]
    %v175 = vpack.c.bf16 %v171, %v170
    %v176 = vpack.c.bf16 %v173, %v172
    %v177 = vld [vmem:[%s6] sm:$0xff]
    %179 = vset.pattern.permute.xlu0 0
    %180 = vperm.xlu0 %179, %v177
    %v181 = vpop.permute.xlu0 %180
    %v184 = vsel %vm144, %v174, 0
    %186 = vmatpush.bf16.msra.mxu0 0
    %187 = vmatpush.bf16.msra.mxu0 0
    %188 = vmatpush.bf16.msra.mxu0 0
    %189 = vmatpush.bf16.msra.mxu0 0
    %190 = vmatpush.bf16.msra.mxu0 0
    %191 = vmatpush.bf16.msra.mxu0 0
    %192 = vmatpush.bf16.msra.mxu0 %v176
    %193 = vmatpush.bf16.msra.mxu0 %v175
    %194 = vmatmul.bf16.gmra.mxu0 %v184
    %v195 = vpop.f32.mrf.mxu0
    %v196 = vadd.f32 %v181, %v195
    %v197 = vpop.f32.mrf.mxu0
    %198 = vdwg.mxu0
    %v199 = vrot.slane %v196, 4
    %v200 = vmax.f32 %v196, %v199
    %v201 = vrot.slane %v200, 2
    %v202 = vmax.f32 %v200, %v201
    %v203 = vrot.slane %v202, 1
    %v204 = vmax.f32 %v202, %v203
    %v205 = vsub.f32 %v196, %v204
    %v206 = vmul.f32 %v205, 1.442695
    %v207 = vpow.pop %v206
    %v208 = vrot.slane %v207, 4
    %v209 = vadd.f32 %v207, %v208
    %v210 = vrot.slane %v209, 2
    %v211 = vadd.f32 %v209, %v210
    %v212 = vrot.slane %v211, 1
    %v213 = vadd.f32 %v211, %v212
    %v214 = vlog2.pop %v213
    %v215 = vmul.f32 %v214, 0.6931472
    %v216 = vadd.f32 %v204, %v215
    %v217 = vsub.f32 %v196, %v216
    %218 = vst [vmem:[#allocation2] sm:$0xff] %v217
    // Predicated region
    $region30: #{tpu_custom_call.1} parent=1 // pred_check
      _
    $region31: #{tpu_custom_call.1} parent=1 // pred_check_branch
      %220 = sbr.rel (0) target = $region33
    $region32: #{tpu_custom_call.1} parent=1 // pred_region
      %222 = vsyncadd [#allocation3], 0
      %s224 = sshll.u32 [#allocation2], 4
      %s225 = int_to_ptr.vmem [resolvable:$true] %s224
      %s226 = sshll.u32 %s7, 4
      %s227 = int_to_ptr.hbm [resolvable:$true] %s226
      %229 = dma.vmem_to_hbm [thread:$0]  %s225, 128, %s227, [#allocation3]
    $region33: #{tpu_custom_call.1} parent=1 // pred_fallthru
      _
    // Predicated region
    $region34: #{tpu_custom_call.1} parent=1 // pred_check
      _
    $region35: #{tpu_custom_call.1} parent=1 // pred_check_branch
      %231 = sbr.rel (0) target = $region37
    $region36: #{tpu_custom_call.1} parent=1 // pred_region
      %233 = dma.done [#allocation3], 128
    $region37: #{tpu_custom_call.1} parent=1 // pred_fallthru
      _
    %234 = vsyncpa [#allocation3], 1

</llo_original>
